<compile_context>
chip_gen: v7x
topology: tpu7x:2x2x1
jax: 0.10.0
libtpu: 0.0.40
codegen_flags: <defaults>
</compile_context>

<pallas_src>
import numpy as np
import jax
import jax.numpy as jnp
from jax import lax
from jax.experimental import pallas as pl
from jax.experimental.pallas import tpu as pltpu


def _make_occlusion_kernel(h_lo, win, r0, ph, w_start, pw):
    """Kernel closure over the static patch geometry (Python ints)."""

    def kernel(perm_ref, img_ref, cov_ref, out_ref):
        # perm_ref (scalar-prefetch, SMEM) is only used by the cover index_map.
        del perm_ref
        # 1) Stream the whole (1, C, H, W) block through (out-of-place copy).
        out_ref[...] = img_ref[...]
        # 2) Merge the cover patch into the sublane-aligned row band
        #    [h_lo, h_lo + win): full-lane-width, aligned-offset store; the
        #    exact ph x pw patch region is selected with an iota mask (VPU).
        img_rows = img_ref[0, :, pl.ds(h_lo, win), :]      # (C, win, W)
        cov_rows = cov_ref[0]                              # (C, win, W), pre-placed
        row = lax.broadcasted_iota(jnp.int32, cov_rows.shape, 1)
        col = lax.broadcasted_iota(jnp.int32, cov_rows.shape, 2)
        in_patch = ((row >= r0) & (row < r0 + ph) &
                    (col >= w_start) & (col < w_start + pw))
        merged = jnp.where(in_patch, cov_rows.astype(img_rows.dtype), img_rows)
        out_ref[0, :, pl.ds(h_lo, win), :] = merged.astype(out_ref.dtype)

    return kernel


def _nearest_src_indices(out_size, in_size):
    # PyTorch F.interpolate(mode='nearest'): src = floor(dst * in / out)
    dst = np.arange(out_size)
    return np.floor(dst * (in_size / out_size)).astype(np.int32)


def random_occlusion(image, cover_image, *, min_ratio=0.125, max_ratio=0.25,
                     proportional=False, target_size=0, seed=0):
    """JAX/Pallas equivalent of RandomOcclusion.forward((image, cover_image)).

    NOTE: randomness (ratios, offsets, batch shuffle) is drawn with host numpy
    at trace time, so under jax.jit every call replays the same occlusion
    geometry — a semantic difference from the PyTorch layer (redraws per call).
    """
    B, C, H, W = image.shape
    Bc, Cc, Hc, Wc = cover_image.shape
    assert (B, C) == (Bc, Cc)

    rng = np.random.RandomState(seed)
    if proportional:
        height_ratio = rng.rand() * (max_ratio - min_ratio) + min_ratio
        width_ratio = height_ratio
    else:
        height_ratio = rng.rand() * (max_ratio - min_ratio) + min_ratio
        width_ratio = rng.rand() * (max_ratio - min_ratio) + min_ratio

    perm = np.arange(B)
    rng.shuffle(perm)

    ph = max(1, int(H * height_ratio))
    pw = max(1, int(W * width_ratio))
    h_start = int(rng.randint(H - ph)) if H > ph else 0   # guard H == ph
    w_start = int(rng.randint(W - pw)) if W > pw else 0   # guard W == pw

    # Sublane-aligned row band that contains the patch rows.
    h_lo = (h_start // 8) * 8
    h_hi = min(H, ((h_start + ph + 7) // 8) * 8)
    win = h_hi - h_lo
    r0 = h_start - h_lo

    # --- tiny plain-JAX glue (no full-size temporaries) ---------------------
    # Nearest-neighbor resize of the (unshuffled) cover to (ph, pw); the batch
    # shuffle itself is applied inside the kernel via the prefetched perm.
    src_h = _nearest_src_indices(ph, Hc)
    src_w = _nearest_src_indices(pw, Wc)
    patch = cover_image[:, :, src_h, :][:, :, :, src_w]        # (B, C, ph, pw)
    # Place the patch at (r0, w_start) inside a (B, C, win, W) slab so the
    # kernel's merge load/store is aligned and full-lane-width.
    cov_slab = jnp.pad(
        patch,
        ((0, 0), (0, 0), (r0, win - r0 - ph), (w_start, W - w_start - pw)))

    perm_j = jnp.asarray(perm, jnp.int32)
    kernel = _make_occlusion_kernel(h_lo, win, r0, ph, w_start, pw)

    grid_spec = pltpu.PrefetchScalarGridSpec(
        num_scalar_prefetch=1,
        grid=(B,),
        in_specs=[
            pl.BlockSpec((1, C, H, W), lambda b, p: (b, 0, 0, 0)),
            # batch shuffle folded into the cover index_map via scalar prefetch
            pl.BlockSpec((1, C, win, W), lambda b, p: (p[b], 0, 0, 0)),
        ],
        out_specs=pl.BlockSpec((1, C, H, W), lambda b, p: (b, 0, 0, 0)),
    )

    out = pl.pallas_call(
        kernel,
        out_shape=jax.ShapeDtypeStruct((B, C, H, W), image.dtype),
        grid_spec=grid_spec,
        compiler_params=pltpu.CompilerParams(
            dimension_semantics=("parallel",)),   # v7x: 2 TCs split batches
    )(perm_j, image, cov_slab)

    # TODO(synk): for very large planes (>=1024^2, v7x 64 MiB VMEM) tile H in
    # the BlockSpecs and set vmem_limit_bytes; whole-plane blocks are fine at
    # typical watermarking resolutions.

    if target_size != 0:
        # TODO(synk): final nearest resize to (target_size, target_size) kept
        # in plain JAX (default target_size=0 path is fully in-kernel).
        th = _nearest_src_indices(target_size, H)
        tw = _nearest_src_indices(target_size, W)
        out = out[:, :, th, :][:, :, :, tw]

    return out, (perm, ph, pw, h_start, w_start, src_h, src_w)


def _reference_numpy(image, cover_image, perm, ph, pw, h_start, w_start,
                     src_h, src_w):
    img = np.asarray(image)
    cov = np.asarray(cover_image)[perm]
    paste = cov[:, :, src_h, :][:, :, :, src_w]   # nearest resize to (ph, pw)
    out = img.copy()
    out[:, :, h_start:h_start + ph, w_start:w_start + pw] = 0.0
    out[:, :, h_start:h_start + ph, w_start:w_start + pw] = paste
    return out


if __name__ == "__main__":
    key = jax.random.PRNGKey(0)
    k1, k2 = jax.random.split(key)
    B, C, H, W = 2, 4, 16, 16
    image = jax.random.normal(k1, (B, C, H, W), jnp.float32)
    cover = jax.random.normal(k2, (B, C, H, W), jnp.float32)

    out, params = random_occlusion(image, cover, seed=0)
    out = jax.block_until_ready(out)

    ref = _reference_numpy(image, cover, *params)
    np.testing.assert_allclose(np.asarray(out), ref, rtol=1e-5, atol=1e-5)
    print("KERNEL_OK")
</pallas_src>

<mosaic_0001>
module attributes {stable_mosaic.version = 11 : i64} {
  func.func @kernel(%arg0: i32, %arg1: memref<2xi32, #tpu.memory_space<smem>>, %arg2: memref<1x4x16x16xf32, #tpu.memory_space<vmem>>, %arg3: memref<1x4x8x16xf32, #tpu.memory_space<vmem>>, %arg4: memref<1x4x16x16xf32, #tpu.memory_space<vmem>>) attributes {dimension_semantics = [#tpu.dimension_semantics<parallel>], iteration_bounds = array<i64: 2>, scalar_prefetch = 1 : i64, scratch_operands = 0 : i64, tpu.core_type = #tpu.core_type<tc>, window_params = [{transform_indices = @transform_0, window_bounds = array<i64: 1, 4, 16, 16>}, {transform_indices = @transform_1, window_bounds = array<i64: 1, 4, 8, 16>}, {transform_indices = @transform_2, window_bounds = array<i64: 1, 4, 16, 16>}]} {
    %c0 = arith.constant 0 : index
    %c0_0 = arith.constant 0 : index
    %c0_1 = arith.constant 0 : index
    %c0_2 = arith.constant 0 : index
    %0 = vector.load %arg2[%c0, %c0_0, %c0_1, %c0_2] : memref<1x4x16x16xf32, #tpu.memory_space<vmem>>, vector<1x4x16x16xf32>
    %c0_3 = arith.constant 0 : index
    %c0_4 = arith.constant 0 : index
    %c0_5 = arith.constant 0 : index
    %c0_6 = arith.constant 0 : index
    %1 = vector.load %arg4[%c0_3, %c0_4, %c0_5, %c0_6] : memref<1x4x16x16xf32, #tpu.memory_space<vmem>>, vector<1x4x16x16xf32>
    tpu.vector_store %arg4[%c0_3, %c0_4, %c0_5, %c0_6], %0 {strides = array<i32>} : memref<1x4x16x16xf32, #tpu.memory_space<vmem>>, vector<1x4x16x16xf32>,
    %c0_7 = arith.constant 0 : index
    %c0_8 = arith.constant 0 : index
    %c8 = arith.constant 8 : index
    %c0_9 = arith.constant 0 : index
    %2 = vector.load %arg2[%c0_7, %c0_8, %c8, %c0_9] : memref<1x4x16x16xf32, #tpu.memory_space<vmem>>, vector<1x4x8x16xf32>
    %3 = vector.shape_cast %2 : vector<1x4x8x16xf32> to vector<4x8x16xf32>
    %c0_10 = arith.constant 0 : index
    %c0_11 = arith.constant 0 : index
    %c0_12 = arith.constant 0 : index
    %c0_13 = arith.constant 0 : index
    %4 = vector.load %arg3[%c0_10, %c0_11, %c0_12, %c0_13] : memref<1x4x8x16xf32, #tpu.memory_space<vmem>>, vector<1x4x8x16xf32>
    %5 = vector.shape_cast %4 : vector<1x4x8x16xf32> to vector<4x8x16xf32>
    %6 = tpu.iota {dimensions = array<i32: 1>} : vector<4x8x16xi32>
    %7 = tpu.iota {dimensions = array<i32: 2>} : vector<4x8x16xi32>
    %c3_i32 = arith.constant 3 : i32
    %8 = vector.broadcast %c3_i32 : i32 to vector<4x8x16xi32>
    %9 = arith.cmpi sge, %6, %8 : vector<4x8x16xi32>
    %c6_i32 = arith.constant 6 : i32
    %10 = vector.broadcast %c6_i32 : i32 to vector<4x8x16xi32>
    %11 = arith.cmpi slt, %6, %10 : vector<4x8x16xi32>
    %12 = arith.andi %9, %11 : vector<4x8x16xi1>
    %c3_i32_14 = arith.constant 3 : i32
    %13 = vector.broadcast %c3_i32_14 : i32 to vector<4x8x16xi32>
    %14 = arith.cmpi sge, %7, %13 : vector<4x8x16xi32>
    %15 = arith.andi %12, %14 : vector<4x8x16xi1>
    %c6_i32_15 = arith.constant 6 : i32
    %16 = vector.broadcast %c6_i32_15 : i32 to vector<4x8x16xi32>
    %17 = arith.cmpi slt, %7, %16 : vector<4x8x16xi32>
    %18 = arith.andi %15, %17 : vector<4x8x16xi1>
    %19 = arith.select %18, %5, %3 : vector<4x8x16xi1>, vector<4x8x16xf32>
    %c0_16 = arith.constant 0 : index
    %c0_17 = arith.constant 0 : index
    %c8_18 = arith.constant 8 : index
    %c0_19 = arith.constant 0 : index
    %20 = vector.load %arg4[%c0_16, %c0_17, %c8_18, %c0_19] : memref<1x4x16x16xf32, #tpu.memory_space<vmem>>, vector<1x4x8x16xf32>
    %21 = vector.shape_cast %20 : vector<1x4x8x16xf32> to vector<4x8x16xf32>
    %22 = vector.shape_cast %19 : vector<4x8x16xf32> to vector<1x4x8x16xf32>
    tpu.vector_store %arg4[%c0_16, %c0_17, %c8_18, %c0_19], %22 {strides = array<i32>} : memref<1x4x16x16xf32, #tpu.memory_space<vmem>>, vector<1x4x8x16xf32>,
    return
  }
  func.func @transform_0(%arg0: i32, %arg1: memref<2xi32, #tpu.memory_space<smem>>) -> (i32, i32, i32, i32) {
    %c0_i32 = arith.constant 0 : i32
    %c0_i32_0 = arith.constant 0 : i32
    %c0_i32_1 = arith.constant 0 : i32
    %c0_i32_2 = arith.constant 0 : i32
    return %arg0, %c0_i32, %c0_i32_0, %c0_i32_1 : i32, i32, i32, i32
  }
  func.func @transform_1(%arg0: i32, %arg1: memref<2xi32, #tpu.memory_space<smem>>) -> (i32, i32, i32, i32) {
    %0 = arith.index_cast %arg0 : i32 to index
    %1 = memref.load %arg1[%0] : memref<2xi32, #tpu.memory_space<smem>>
    %c0_i32 = arith.constant 0 : i32
    %c0_i32_0 = arith.constant 0 : i32
    %c0_i32_1 = arith.constant 0 : i32
    %c0_i32_2 = arith.constant 0 : i32
    return %1, %c0_i32, %c0_i32_0, %c0_i32_1 : i32, i32, i32, i32
  }
  func.func @transform_2(%arg0: i32, %arg1: memref<2xi32, #tpu.memory_space<smem>>) -> (i32, i32, i32, i32) {
    %c0_i32 = arith.constant 0 : i32
    %c0_i32_0 = arith.constant 0 : i32
    %c0_i32_1 = arith.constant 0 : i32
    %c0_i32_2 = arith.constant 0 : i32
    return %arg0, %c0_i32, %c0_i32_0, %c0_i32_1 : i32, i32, i32, i32
  }
}

</mosaic_0001>

<llo_original>
// kernel: tpu_custom_call.1
$region0: #{tpu_custom_call.1}
  #allocation0 [shape = 'u32[]', space=smem, size = 0x4, offset = 0x4, fixed_abs, tag = 'smem constant byte address 0x4 - core index']
  #allocation1 [shape = 'u32[144,128]{1,0:T(1,128)}', space=vmem, size = 0x12000, scoped, tag = 'internal scratch']
  #allocation2 [shape = 's32[1]{0}', space=sflag, size = 0x4, scoped, tag = 'scoped memory for tpu_custom_call.1']
  #allocation3 [shape = 'u8[512]{0}', space=smem, size = 0x200, scoped, tag = 'prefetched SMEM operand 0']
  %s0 = inlined_call_operand.hbm [shape: s32[2], index: 0, kind: input, shape index: {}]
  %s1 = inlined_call_operand.hbm [shape: f32[2,4,16,16], index: 1, kind: input, shape index: {}]
  %s2 = inlined_call_operand.hbm [shape: f32[2,4,8,16], index: 2, kind: input, shape index: {}]
  %s3 = inlined_call_operand.hbm [shape: f32[2,4,16,16], index: 3, kind: output, shape index: {}]
  %s4 = sld [smem:[#allocation0]]
  $region49: #{tpu_custom_call.1} parent=0
    _
  %s6 = ssub.s32 1, %s4
  %s7 = scalar_select 0, %s6, %s4
  %9 = dma.hbm_to_smem %s0, 16, [#allocation3], [#allocation2]
  %10 = dma.done [#allocation2], 16
  %11 = sfence
  $region1: #{tpu_custom_call.1} parent=0
    #allocation4 [shape = 'u8[65536]{0}', space=vmem, size = 0x10000, scoped, tag = 'input window, operand 1']
    #allocation5 [shape = 's32[2]{0}', space=sflag, size = 0x8, scoped, tag = 'scoped memory for tpu_custom_call.1']
    #allocation6 [shape = 's32[2]{0}', space=sflag, size = 0x8, scoped, tag = 'scoped memory for tpu_custom_call.1']
    #allocation7 [shape = 'u8[32768]{0}', space=vmem, size = 0x8000, scoped, tag = 'input window, operand 2']
    #allocation8 [shape = 's32[2]{0}', space=sflag, size = 0x8, scoped, tag = 'scoped memory for tpu_custom_call.1']
    #allocation9 [shape = 'u8[65536]{0}', space=vmem, size = 0x10000, scoped, tag = 'output window, operand 0']
    %12 = vsyncpa [#allocation5], 0
    %s13 = scalar_lea.sflag [#allocation5], 1
    %14 = vsyncpa %s13, 0
    %15 = vsyncpa [#allocation8], 0
    %s16 = scalar_lea.sflag [#allocation8], 1
    %17 = vsyncpa %s16, 0
    %18 = vsyncpa [#allocation6], 0
    %s19 = scalar_lea.sflag [#allocation6], 1
    %20 = vsyncpa %s19, 0
    loop: start=0, step=1, limit=4
    $region2: #{tpu_custom_call.1} parent=1 // loop_pre_header
      _
    $region3: #{tpu_custom_call.1} parent=1 // loop_header
      %s22 = sphi 0, %s26
      %p23 = scmp.ge.s32.totalorder %s22, 4
      %s32 = sphi 0, %s34
      %s35 = sphi 0, %s32
      %s36 = sphi 0, %s35
      %s52 = sphi 0, %s36
      %s60 = sphi 0, %s62
      %s63 = sphi 0, %s60
      %s64 = sphi 0, %s63
      %s80 = sphi 0, %s64
      %s86 = sphi 0, %s88
      %s89 = sphi 0, %s86
      %s90 = sphi 0, %s89
      %s106 = sphi 0, %s90
    $region4: #{tpu_custom_call.1} parent=1 // loop_header_branch
      %25 = sbr.rel (%p23) target = $region8
    $region5: #{tpu_custom_call.1} parent=1 // loop_body
      %s27 = ssub.s32 %s22, 1
      %s28 = ssub.s32 %s22, 2
      %s29 = sadd.s32 %s22, 1
      %s30 = ssub.s32 %s22, %s29
      %p31 = scmp.eq.s32.totalorder %s30, 0
      %s33 = sadd.s32 %s32, 1
      %s34 = scalar_select %p31, %s32, %s33
      %p37 = pneg %p31
      %p38 = scmp.eq.s32.totalorder %s22, 1
      %p39 = por %p37, %p38
      %p40 = scmp.ne.s32.totalorder %s32, %s35
      %p41 = scmp.eq.s32.totalorder %s22, 0
      %p42 = por %p40, %p41
      %p43 = scmp.ne.s32.totalorder %s32, %s35
      %p44 = scmp.eq.s32.totalorder %s27, 1
      %p45 = por %p43, %p44
      %p46 = scmp.ne.s32.totalorder %s35, %s36
      %p47 = scmp.eq.s32.totalorder %s27, 0
      %p48 = por %p46, %p47
      %p49 = scmp.ne.s32.totalorder %s35, %s36
      %p50 = scmp.eq.s32.totalorder %s28, 1
      %p51 = por %p49, %p50
      %p53 = scmp.ne.s32.totalorder %s36, %s52
      %p54 = scmp.eq.s32.totalorder %s28, 0
      %p55 = por %p53, %p54
      %s56 = sld [smem:[#allocation3 + %s22]]
      %s57 = sld [smem:[#allocation3 + %s29]]
      %s58 = ssub.s32 %s56, %s57
      %p59 = scmp.eq.s32.totalorder %s58, 0
      %s61 = sadd.s32 %s60, 1
      %s62 = scalar_select %p59, %s60, %s61
      %p65 = pneg %p59
      %p66 = scmp.eq.s32.totalorder %s22, 1
      %p67 = por %p65, %p66
      %p68 = scmp.ne.s32.totalorder %s60, %s63
      %p69 = scmp.eq.s32.totalorder %s22, 0
      %p70 = por %p68, %p69
      %p71 = scmp.ne.s32.totalorder %s60, %s63
      %p72 = scmp.eq.s32.totalorder %s27, 1
      %p73 = por %p71, %p72
      %p74 = scmp.ne.s32.totalorder %s63, %s64
      %p75 = scmp.eq.s32.totalorder %s27, 0
      %p76 = por %p74, %p75
      %p77 = scmp.ne.s32.totalorder %s63, %s64
      %p78 = scmp.eq.s32.totalorder %s28, 1
      %p79 = por %p77, %p78
      %p81 = scmp.ne.s32.totalorder %s64, %s80
      %p82 = scmp.eq.s32.totalorder %s28, 0
      %p83 = por %p81, %p82
      %s84 = ssub.s32 %s22, %s29
      %p85 = scmp.eq.s32.totalorder %s84, 0
      %s87 = sadd.s32 %s86, 1
      %s88 = scalar_select %p85, %s86, %s87
      %p91 = pneg %p85
      %p92 = scmp.eq.s32.totalorder %s22, 1
      %p93 = por %p91, %p92
      %p94 = scmp.ne.s32.totalorder %s86, %s89
      %p95 = scmp.eq.s32.totalorder %s22, 0
      %p96 = por %p94, %p95
      %p97 = scmp.ne.s32.totalorder %s86, %s89
      %p98 = scmp.eq.s32.totalorder %s27, 1
      %p99 = por %p97, %p98
      %p100 = scmp.ne.s32.totalorder %s89, %s90
      %p101 = scmp.eq.s32.totalorder %s27, 0
      %p102 = por %p100, %p101
      %p103 = scmp.ne.s32.totalorder %s89, %s90
      %p104 = scmp.eq.s32.totalorder %s28, 1
      %p105 = por %p103, %p104
      %p107 = scmp.ne.s32.totalorder %s90, %s106
      %p108 = scmp.eq.s32.totalorder %s28, 0
      %p109 = por %p107, %p108
      %p110 = scmp.le.s32.totalorder 1, %s22
      %p111 = scmp.lt.s32.totalorder %s22, 3
      %p112 = pnand %p110, %p111
      %p113 = pneg %p112
      // Predicated region
      $region9: #{tpu_custom_call.1} parent=5 // pred_check
        _
      $region10: #{tpu_custom_call.1} parent=5 // pred_check_branch
        %115 = sbr.rel (%p112) target = $region12
      $region11: #{tpu_custom_call.1} parent=5 // pred_region
        %s116 = ssub.s32 %s22, 1
      $region12: #{tpu_custom_call.1} parent=5 // pred_fallthru
        _
      %p117 = scmp.lt.s32.totalorder %s22, 2
      // Predicated region
      $region13: #{tpu_custom_call.1} parent=5 // pred_check
        %p118 = pneg %p117
      $region14: #{tpu_custom_call.1} parent=5 // pred_check_branch
        %120 = sbr.rel (%p118) target = $region16
      $region15: #{tpu_custom_call.1} parent=5 // pred_region
        // Predicated region
        $region17: #{tpu_custom_call.1} parent=15 // pred_check
          %p121 = pneg %p42
        $region18: #{tpu_custom_call.1} parent=15 // pred_check_branch
          %123 = sbr.rel (%p121) target = $region20
        $region19: #{tpu_custom_call.1} parent=15 // pred_region
          %s124 = sand.u32 %s32, 1
          %s125 = scalar_lea.sflag [#allocation5], %s124
          %s126 = sand.u32 %s32, 1
          %s127 = smul.addr %s126, 64
          %s128 = scalar_lea.vmem [#allocation4], %s127
          %s130 = ssub.s32 1024, 1024
          %131 = vsyncadd %s125, %s130
          %s132 = smul.addr %s22, 8
          %s133 = smul.addr %s132, 128
          %s134 = scalar_lea.hbm %s1, %s133
          %s135 = sshll.u32 %s128, 4
          %s136 = int_to_ptr.vmem [resolvable:$true] %s135
          %141 = dma.hbm_to_vmem [thread:$0]  %s134, 1024, %s136, %s125, 128, 128, 8
        $region20: #{tpu_custom_call.1} parent=15 // pred_fallthru
          _
        // Predicated region
        $region21: #{tpu_custom_call.1} parent=15 // pred_check
          %p142 = pneg %p70
        $region22: #{tpu_custom_call.1} parent=15 // pred_check_branch
          %144 = sbr.rel (%p142) target = $region24
        $region23: #{tpu_custom_call.1} parent=15 // pred_region
          %s145 = sand.u32 %s60, 1
          %s146 = scalar_lea.sflag [#allocation8], %s145
          %s147 = sand.u32 %s60, 1
          %s148 = smul.addr %s147, 32
          %s149 = scalar_lea.vmem [#allocation7], %s148
          %s150 = sld [smem:[#allocation3 + %s22]]
          %s152 = ssub.s32 512, 512
          %153 = vsyncadd %s146, %s152
          %s154 = smul.addr %s150, 4
          %s155 = smul.addr %s154, 128
          %s156 = scalar_lea.hbm %s2, %s155
          %s157 = sshll.u32 %s149, 4
          %s158 = int_to_ptr.vmem [resolvable:$true] %s157
          %163 = dma.hbm_to_vmem [thread:$0]  %s156, 512, %s158, %s146, 128, 128, 8
        $region24: #{tpu_custom_call.1} parent=15 // pred_fallthru
          _
      $region16: #{tpu_custom_call.1} parent=5 // pred_fallthru
        _
      %p164 = scmp.le.s32.totalorder 1, %s22
      %p165 = scmp.lt.s32.totalorder %s22, 3
      %p166 = pnand %p164, %p165
      %p167 = pneg %p166
      // Predicated region
      $region25: #{tpu_custom_call.1} parent=5 // pred_check
        _
      $region26: #{tpu_custom_call.1} parent=5 // pred_check_branch
        %169 = sbr.rel (%p166) target = $region28
      $region27: #{tpu_custom_call.1} parent=5 // pred_region
        %s170 = ssub.s32 %s22, 1
        %s171 = sand.u32 %s35, 1
        %s172 = scalar_lea.sflag [#allocation5], %s171
        %s173 = sand.u32 %s35, 1
        %s174 = smul.addr %s173, 64
        %s175 = scalar_lea.vmem [#allocation4], %s174
        // Predicated region
        $region29: #{tpu_custom_call.1} parent=27 // pred_check
          %p176 = pneg %p48
        $region30: #{tpu_custom_call.1} parent=27 // pred_check_branch
          %178 = sbr.rel (%p176) target = $region32
        $region31: #{tpu_custom_call.1} parent=27 // pred_region
          %179 = dma.done %s172, 1024
        $region32: #{tpu_custom_call.1} parent=27 // pred_fallthru
          _
        %s180 = sand.u32 %s63, 1
        %s181 = scalar_lea.sflag [#allocation8], %s180
        %s182 = sand.u32 %s63, 1
        %s183 = smul.addr %s182, 32
        %s184 = scalar_lea.vmem [#allocation7], %s183
        // Predicated region
        $region33: #{tpu_custom_call.1} parent=27 // pred_check
          %p185 = pneg %p76
        $region34: #{tpu_custom_call.1} parent=27 // pred_check_branch
          %187 = sbr.rel (%p185) target = $region36
        $region35: #{tpu_custom_call.1} parent=27 // pred_region
          %188 = dma.done %s181, 512
        $region36: #{tpu_custom_call.1} parent=27 // pred_fallthru
          _
        %s189 = sand.u32 %s35, 1
        %s190 = scalar_lea.sflag [#allocation5], %s189
        %s191 = sand.u32 %s35, 1
        %s192 = smul.addr %s191, 64
        %s193 = scalar_lea.vmem [#allocation4], %s192
        %p194 = pneg %p48
        %p195 = pneg %p45
        %s196 = sand.u32 %s63, 1
        %s197 = scalar_lea.sflag [#allocation8], %s196
        %s198 = sand.u32 %s63, 1
        %s199 = smul.addr %s198, 32
        %s200 = scalar_lea.vmem [#allocation7], %s199
        %p201 = pneg %p76
        %p202 = pneg %p73
        %p203 = pneg %p102
        %p204 = pneg %p99
        %s205 = sand.u32 %s89, 1
        %s206 = scalar_lea.sflag [#allocation6], %s205
        %s207 = sand.u32 %s89, 1
        %s208 = smul.addr %s207, 64
        %s209 = scalar_lea.vmem [#allocation9], %s208
        %s210 = sld [smem:[#allocation3 + %s27]]
        %v211 = vld [vmem:[%s175] sm:$0xff]
        %v212 = vld [vmem:[%s175 + $0x8] sm:$0xff]
        %v213 = vld [vmem:[%s175 + $0x10] sm:$0xff]
        %v214 = vld [vmem:[%s175 + $0x18] sm:$0xff]
        %v215 = vld [vmem:[%s175 + $0x20] sm:$0xff]
        %v216 = vld [vmem:[%s175 + $0x28] sm:$0xff]
        %v217 = vld [vmem:[%s175 + $0x30] sm:$0xff]
        %v218 = vld [vmem:[%s175 + $0x38] sm:$0xff]
        %vm219 = vcmask 130048
        %220 = vst.msk [vmem:[%s209] sm:$0xff] %vm219, %v211
        %221 = vst.msk [vmem:[%s209 + $0x8] sm:$0xff] %vm219, %v212
        %222 = vst.msk [vmem:[%s209 + $0x10] sm:$0xff] %vm219, %v213
        %223 = vst.msk [vmem:[%s209 + $0x18] sm:$0xff] %vm219, %v214
        %224 = vst.msk [vmem:[%s209 + $0x20] sm:$0xff] %vm219, %v215
        %225 = vst.msk [vmem:[%s209 + $0x28] sm:$0xff] %vm219, %v216
        %226 = vst.msk [vmem:[%s209 + $0x30] sm:$0xff] %vm219, %v217
        %227 = vst.msk [vmem:[%s209 + $0x38] sm:$0xff] %vm219, %v218
        %v228 = vld [vmem:[%s175 + $0x8] sm:$0xff]
        %v229 = vld [vmem:[%s175 + $0x18] sm:$0xff]
        %v230 = vld [vmem:[%s175 + $0x28] sm:$0xff]
        %v231 = vld [vmem:[%s175 + $0x38] sm:$0xff]
        %v232 = vld [vmem:[%s184] sm:$0xff]
        %v233 = vld [vmem:[%s184 + $0x8] sm:$0xff]
        %v234 = vld [vmem:[%s184 + $0x10] sm:$0xff]
        %v235 = vld [vmem:[%s184 + $0x18] sm:$0xff]
        %v236 = vlaneseq
        %v237 = vshrl.u32 %v236, 7
        %v238 = vlaneseq
        %v239 = vand.u32 %v238, 127
        %vm240 = vcmp.ge.s32.totalorder %v237, 3
        %vm241 = vcmp.lt.s32.totalorder %v237, 6
        %vm242 = vmand %vm240, %vm241
        %vm243 = vcmp.ge.s32.totalorder %v239, 3
        %vm244 = vmand %vm242, %vm243
        %vm245 = vcmp.lt.s32.totalorder %v239, 6
        %vm246 = vmand %vm244, %vm245
        %v247 = vsel %vm246, %v232, %v228
        %v248 = vsel %vm246, %v233, %v229
        %v249 = vsel %vm246, %v234, %v230
        %v250 = vsel %vm246, %v235, %v231
        %251 = vst.msk [vmem:[%s209 + $0x8] sm:$0xff] %vm219, %v247
        %252 = vst.msk [vmem:[%s209 + $0x18] sm:$0xff] %vm219, %v248
        %253 = vst.msk [vmem:[%s209 + $0x28] sm:$0xff] %vm219, %v249
        %254 = vst.msk [vmem:[%s209 + $0x38] sm:$0xff] %vm219, %v250
        %s255 = sand.u32 %s89, 1
        %s256 = scalar_lea.sflag [#allocation6], %s255
        %s257 = sand.u32 %s89, 1
        %s258 = smul.addr %s257, 64
        %s259 = scalar_lea.vmem [#allocation9], %s258
        // Predicated region
        $region37: #{tpu_custom_call.1} parent=27 // pred_check
          %p260 = pneg %p99
        $region38: #{tpu_custom_call.1} parent=27 // pred_check_branch
          %262 = sbr.rel (%p260) target = $region40
        $region39: #{tpu_custom_call.1} parent=27 // pred_region
          %s264 = ssub.s32 1024, 1024
          %265 = vsyncadd %s256, %s264
          %s266 = smul.addr %s27, 8
          %s267 = smul.addr %s266, 128
          %s268 = scalar_lea.hbm %s3, %s267
          %s269 = sshll.u32 %s259, 4
          %s270 = int_to_ptr.vmem [resolvable:$true] %s269
          %275 = dma.vmem_to_hbm [thread:$0]  %s270, 1024, %s268, %s256, 128, 128, 8
        $region40: #{tpu_custom_call.1} parent=27 // pred_fallthru
          _
      $region28: #{tpu_custom_call.1} parent=5 // pred_fallthru
        _
      %p276 = scmp.le.s32.totalorder 2, %s22
      // Predicated region
      $region41: #{tpu_custom_call.1} parent=5 // pred_check
        %p277 = pneg %p276
      $region42: #{tpu_custom_call.1} parent=5 // pred_check_branch
        %279 = sbr.rel (%p277) target = $region44
      $region43: #{tpu_custom_call.1} parent=5 // pred_region
        %s280 = ssub.s32 %s22, 2
        // Predicated region
        $region45: #{tpu_custom_call.1} parent=43 // pred_check
          %p281 = pneg %p105
        $region46: #{tpu_custom_call.1} parent=43 // pred_check_branch
          %283 = sbr.rel (%p281) target = $region48
        $region47: #{tpu_custom_call.1} parent=43 // pred_region
          %s284 = sand.u32 %s90, 1
          %s285 = scalar_lea.sflag [#allocation6], %s284
          %s286 = sand.u32 %s90, 1
          %s287 = smul.addr %s286, 64
          %s288 = scalar_lea.vmem [#allocation9], %s287
          %289 = dma.done %s285, 1024
        $region48: #{tpu_custom_call.1} parent=43 // pred_fallthru
          _
      $region44: #{tpu_custom_call.1} parent=5 // pred_fallthru
        _
    $region6: #{tpu_custom_call.1} parent=1 // loop_footer
      %s26 = sadd.s32 1, %s22
    $region7: #{tpu_custom_call.1} parent=1 // loop_footer_branch
      %21 = sbr.rel target = $region3
    $region8: #{tpu_custom_call.1} parent=1 // loop_exit
      _
    %290 = vsyncpa [#allocation5], 1
    %s291 = scalar_lea.sflag [#allocation5], 1
    %292 = vsyncpa %s291, 1
    %293 = vsyncpa [#allocation8], 1
    %s294 = scalar_lea.sflag [#allocation8], 1
    %295 = vsyncpa %s294, 1
    %296 = vsyncpa [#allocation6], 1
    %s297 = scalar_lea.sflag [#allocation6], 1
    %298 = vsyncpa %s297, 1

</llo_original>
